<compile_context>
chip_gen: v5e
topology: v5e:2x2
jax: 0.10.0
libtpu: 0.0.40
codegen_flags: <defaults>
</compile_context>

<pallas_src>
import functools
import math

import jax
import jax.numpy as jnp
from jax.experimental import pallas as pl
from jax.experimental.pallas import tpu as pltpu


def _embed_kernel(ids_ref, emb_hbm, o_ref, vbuf, sems, *, tok_block, scale):
    """Gather `tok_block` embedding rows per grid step, double-buffered.

    ids_ref : (padded_tokens,) int32 in SMEM (scalar-prefetched token ids)
    emb_hbm : (vocab, d_model) embedding table, raw HBM ref (memory_space=ANY)
    o_ref   : (tok_block, d_model) output tile in VMEM
    vbuf    : (2, tok_block, d_model) VMEM gather buffer (double buffer)
    sems    : (2, tok_block) DMA completion semaphores
    """
    i = pl.program_id(0)
    n_blocks = pl.num_programs(0)

    def issue(block_idx, slot):
        base = block_idx * tok_block
        for t in range(tok_block):
            tok = ids_ref[base + t]
            pltpu.make_async_copy(
                emb_hbm.at[tok], vbuf.at[slot, t], sems.at[slot, t]
            ).start()

    # Prime the pipeline on the first step.
    @pl.when(i == 0)
    def _():
        issue(0, 0)

    # Prefetch next block's rows while the current block is consumed.
    @pl.when(i + 1 < n_blocks)
    def _():
        issue(i + 1, (i + 1) % 2)

    # Wait for the current block's gathers (issued at step i-1 or by the prime).
    slot = i % 2
    for t in range(tok_block):
        pltpu.make_async_copy(
            emb_hbm.at[0], vbuf.at[slot, t], sems.at[slot, t]
        ).wait()

    rows = vbuf[slot].astype(jnp.float32) * jnp.float32(scale)
    o_ref[...] = rows.astype(o_ref.dtype)


def input_embeddings(token_ids, embedding_table, *, tok_block: int = 8):
    """token_ids: integer array (...,); embedding_table: (vocab, d_model).

    Returns embedding_table[token_ids] * sqrt(d_model) with shape (..., d_model).
    """
    orig_shape = token_ids.shape
    vocab, d_model = embedding_table.shape
    scale = math.sqrt(d_model)

    ids_flat = token_ids.reshape(-1).astype(jnp.int32)
    n_tok = ids_flat.shape[0]
    n_blocks = pl.cdiv(n_tok, tok_block)
    n_pad = n_blocks * tok_block
    if n_pad != n_tok:
        # Pad with token 0 (a valid row); padded outputs are sliced off below.
        ids_flat = jnp.pad(ids_flat, (0, n_pad - n_tok))

    kernel = functools.partial(_embed_kernel, tok_block=tok_block, scale=scale)

    out = pl.pallas_call(
        kernel,
        out_shape=jax.ShapeDtypeStruct((n_pad, d_model), embedding_table.dtype),
        grid_spec=pltpu.PrefetchScalarGridSpec(
            num_scalar_prefetch=1,              # token ids -> SMEM
            grid=(n_blocks,),
            in_specs=[pl.BlockSpec(memory_space=pl.ANY)],   # table stays in HBM
            out_specs=pl.BlockSpec((tok_block, d_model), lambda i, ids: (i, 0)),
            scratch_shapes=[
                pltpu.VMEM((2, tok_block, d_model), embedding_table.dtype),
                pltpu.SemaphoreType.DMA((2, tok_block)),
            ],
        ),
        compiler_params=pltpu.CompilerParams(
            # Cross-step double-buffer carry => this axis must stay sequential.
            dimension_semantics=("arbitrary",),
        ),
    )(ids_flat, embedding_table)

    if n_pad != n_tok:
        out = out[:n_tok]
    return out.reshape(*orig_shape, d_model)


def _reference(token_ids, embedding_table):
    d_model = embedding_table.shape[1]
    return embedding_table[token_ids] * math.sqrt(d_model)


if __name__ == "__main__":
    key = jax.random.PRNGKey(0)
    k_ids, k_emb = jax.random.split(key)

    batch, seq = 2, 8
    vocab_size, d_model = 100, 128   # d_model multiple of 128 -> lane-dense stores

    token_ids = jax.random.randint(k_ids, (batch, seq), 0, vocab_size, dtype=jnp.int32)
    # Deterministic stand-in for nn.Embedding's weight (N(0,1) init).
    embedding_table = jax.random.normal(k_emb, (vocab_size, d_model), dtype=jnp.float32)

    out = input_embeddings(token_ids, embedding_table, tok_block=8)
    out = jax.block_until_ready(out)

    ref = _reference(token_ids, embedding_table)
    assert out.shape == (batch, seq, d_model)
    assert jnp.allclose(out, ref, atol=1e-5, rtol=1e-5), "mismatch vs reference"

    print("KERNEL_OK")
</pallas_src>

<mosaic_0001>
module attributes {stable_mosaic.version = 11 : i64} {
  func.func @_embed_kernel(%arg0: i32, %arg1: memref<16xi32, #tpu.memory_space<smem>>, %arg2: memref<100x128xf32, #tpu.memory_space<any>>, %arg3: memref<8x128xf32, #tpu.memory_space<vmem>>, %arg4: memref<2x8x128xf32, #tpu.memory_space<vmem>>, %arg5: memref<2x8x!tpu.dma_semaphore, #tpu.memory_space<semaphore_mem>>) attributes {dimension_semantics = [#tpu.dimension_semantics<arbitrary>], iteration_bounds = array<i64: 2>, scalar_prefetch = 1 : i64, scratch_operands = 2 : i64, tpu.core_type = #tpu.core_type<tc>, window_params = [{}, {transform_indices = @transform_1, window_bounds = array<i64: 8, 128>}]} {
    %c0_i32 = arith.constant 0 : i32
    %0 = arith.cmpi eq, %arg0, %c0_i32 : i32
    %1 = arith.extui %0 : i1 to i32
    %c0_i32_0 = arith.constant 0 : i32
    %2 = arith.cmpi ne, %1, %c0_i32_0 : i32
    scf.if %2 {
      %c0_46 = arith.constant 0 : index
      %71 = memref.load %arg1[%c0_46] : memref<16xi32, #tpu.memory_space<smem>>
      %c0_i32_47 = arith.constant 0 : i32
      %c0_i32_48 = arith.constant 0 : i32
      %c0_i32_49 = arith.constant 0 : i32
      %c0_i32_50 = arith.constant 0 : i32
      %c0_i32_51 = arith.constant 0 : i32
      %72 = tpu.memref_slice %arg2[%71, %c0_i32_51] : memref<100x128xf32, #tpu.memory_space<any>> -> memref<1x128xf32, #tpu.memory_space<any>>
      %73 = tpu.memref_squeeze %72 : memref<1x128xf32, #tpu.memory_space<any>> -> memref<128xf32, #tpu.memory_space<any>>
      %c0_i32_52 = arith.constant 0 : i32
      %74 = tpu.memref_slice %arg4[%c0_i32_47, %c0_i32_48, %c0_i32_52] : memref<2x8x128xf32, #tpu.memory_space<vmem>> -> memref<1x1x128xf32, #tpu.memory_space<vmem>>
      %75 = tpu.memref_squeeze %74 : memref<1x1x128xf32, #tpu.memory_space<vmem>> -> memref<128xf32, #tpu.memory_space<vmem>>
      %76 = tpu.memref_slice %arg5[%c0_i32_49, %c0_i32_50] : memref<2x8x!tpu.dma_semaphore, #tpu.memory_space<semaphore_mem>> -> memref<1x1x!tpu.dma_semaphore, #tpu.memory_space<semaphore_mem>>
      %77 = tpu.memref_squeeze %76 : memref<1x1x!tpu.dma_semaphore, #tpu.memory_space<semaphore_mem>> -> memref<!tpu.dma_semaphore, #tpu.memory_space<semaphore_mem>>
      tpu.enqueue_dma source(%73 : memref<128xf32, #tpu.memory_space<any>>) target(%75 : memref<128xf32, #tpu.memory_space<vmem>>) target_semaphore(%77 : memref<!tpu.dma_semaphore, #tpu.memory_space<semaphore_mem>>)
      %c1 = arith.constant 1 : index
      %78 = memref.load %arg1[%c1] : memref<16xi32, #tpu.memory_space<smem>>
      %c0_i32_53 = arith.constant 0 : i32
      %c1_i32_54 = arith.constant 1 : i32
      %c0_i32_55 = arith.constant 0 : i32
      %c1_i32_56 = arith.constant 1 : i32
      %c0_i32_57 = arith.constant 0 : i32
      %79 = tpu.memref_slice %arg2[%78, %c0_i32_57] : memref<100x128xf32, #tpu.memory_space<any>> -> memref<1x128xf32, #tpu.memory_space<any>>
      %80 = tpu.memref_squeeze %79 : memref<1x128xf32, #tpu.memory_space<any>> -> memref<128xf32, #tpu.memory_space<any>>
      %c0_i32_58 = arith.constant 0 : i32
      %81 = tpu.memref_slice %arg4[%c0_i32_53, %c1_i32_54, %c0_i32_58] : memref<2x8x128xf32, #tpu.memory_space<vmem>> -> memref<1x1x128xf32, #tpu.memory_space<vmem>>
      %82 = tpu.memref_squeeze %81 : memref<1x1x128xf32, #tpu.memory_space<vmem>> -> memref<128xf32, #tpu.memory_space<vmem>>
      %83 = tpu.memref_slice %arg5[%c0_i32_55, %c1_i32_56] : memref<2x8x!tpu.dma_semaphore, #tpu.memory_space<semaphore_mem>> -> memref<1x1x!tpu.dma_semaphore, #tpu.memory_space<semaphore_mem>>
      %84 = tpu.memref_squeeze %83 : memref<1x1x!tpu.dma_semaphore, #tpu.memory_space<semaphore_mem>> -> memref<!tpu.dma_semaphore, #tpu.memory_space<semaphore_mem>>
      tpu.enqueue_dma source(%80 : memref<128xf32, #tpu.memory_space<any>>) target(%82 : memref<128xf32, #tpu.memory_space<vmem>>) target_semaphore(%84 : memref<!tpu.dma_semaphore, #tpu.memory_space<semaphore_mem>>)
      %c2 = arith.constant 2 : index
      %85 = memref.load %arg1[%c2] : memref<16xi32, #tpu.memory_space<smem>>
      %c0_i32_59 = arith.constant 0 : i32
      %c2_i32_60 = arith.constant 2 : i32
      %c0_i32_61 = arith.constant 0 : i32
      %c2_i32_62 = arith.constant 2 : i32
      %c0_i32_63 = arith.constant 0 : i32
      %86 = tpu.memref_slice %arg2[%85, %c0_i32_63] : memref<100x128xf32, #tpu.memory_space<any>> -> memref<1x128xf32, #tpu.memory_space<any>>
      %87 = tpu.memref_squeeze %86 : memref<1x128xf32, #tpu.memory_space<any>> -> memref<128xf32, #tpu.memory_space<any>>
      %c0_i32_64 = arith.constant 0 : i32
      %88 = tpu.memref_slice %arg4[%c0_i32_59, %c2_i32_60, %c0_i32_64] : memref<2x8x128xf32, #tpu.memory_space<vmem>> -> memref<1x1x128xf32, #tpu.memory_space<vmem>>
      %89 = tpu.memref_squeeze %88 : memref<1x1x128xf32, #tpu.memory_space<vmem>> -> memref<128xf32, #tpu.memory_space<vmem>>
      %90 = tpu.memref_slice %arg5[%c0_i32_61, %c2_i32_62] : memref<2x8x!tpu.dma_semaphore, #tpu.memory_space<semaphore_mem>> -> memref<1x1x!tpu.dma_semaphore, #tpu.memory_space<semaphore_mem>>
      %91 = tpu.memref_squeeze %90 : memref<1x1x!tpu.dma_semaphore, #tpu.memory_space<semaphore_mem>> -> memref<!tpu.dma_semaphore, #tpu.memory_space<semaphore_mem>>
      tpu.enqueue_dma source(%87 : memref<128xf32, #tpu.memory_space<any>>) target(%89 : memref<128xf32, #tpu.memory_space<vmem>>) target_semaphore(%91 : memref<!tpu.dma_semaphore, #tpu.memory_space<semaphore_mem>>)
      %c3 = arith.constant 3 : index
      %92 = memref.load %arg1[%c3] : memref<16xi32, #tpu.memory_space<smem>>
      %c0_i32_65 = arith.constant 0 : i32
      %c3_i32_66 = arith.constant 3 : i32
      %c0_i32_67 = arith.constant 0 : i32
      %c3_i32_68 = arith.constant 3 : i32
      %c0_i32_69 = arith.constant 0 : i32
      %93 = tpu.memref_slice %arg2[%92, %c0_i32_69] : memref<100x128xf32, #tpu.memory_space<any>> -> memref<1x128xf32, #tpu.memory_space<any>>
      %94 = tpu.memref_squeeze %93 : memref<1x128xf32, #tpu.memory_space<any>> -> memref<128xf32, #tpu.memory_space<any>>
      %c0_i32_70 = arith.constant 0 : i32
      %95 = tpu.memref_slice %arg4[%c0_i32_65, %c3_i32_66, %c0_i32_70] : memref<2x8x128xf32, #tpu.memory_space<vmem>> -> memref<1x1x128xf32, #tpu.memory_space<vmem>>
      %96 = tpu.memref_squeeze %95 : memref<1x1x128xf32, #tpu.memory_space<vmem>> -> memref<128xf32, #tpu.memory_space<vmem>>
      %97 = tpu.memref_slice %arg5[%c0_i32_67, %c3_i32_68] : memref<2x8x!tpu.dma_semaphore, #tpu.memory_space<semaphore_mem>> -> memref<1x1x!tpu.dma_semaphore, #tpu.memory_space<semaphore_mem>>
      %98 = tpu.memref_squeeze %97 : memref<1x1x!tpu.dma_semaphore, #tpu.memory_space<semaphore_mem>> -> memref<!tpu.dma_semaphore, #tpu.memory_space<semaphore_mem>>
      tpu.enqueue_dma source(%94 : memref<128xf32, #tpu.memory_space<any>>) target(%96 : memref<128xf32, #tpu.memory_space<vmem>>) target_semaphore(%98 : memref<!tpu.dma_semaphore, #tpu.memory_space<semaphore_mem>>)
      %c4 = arith.constant 4 : index
      %99 = memref.load %arg1[%c4] : memref<16xi32, #tpu.memory_space<smem>>
      %c0_i32_71 = arith.constant 0 : i32
      %c4_i32_72 = arith.constant 4 : i32
      %c0_i32_73 = arith.constant 0 : i32
      %c4_i32_74 = arith.constant 4 : i32
      %c0_i32_75 = arith.constant 0 : i32
      %100 = tpu.memref_slice %arg2[%99, %c0_i32_75] : memref<100x128xf32, #tpu.memory_space<any>> -> memref<1x128xf32, #tpu.memory_space<any>>
      %101 = tpu.memref_squeeze %100 : memref<1x128xf32, #tpu.memory_space<any>> -> memref<128xf32, #tpu.memory_space<any>>
      %c0_i32_76 = arith.constant 0 : i32
      %102 = tpu.memref_slice %arg4[%c0_i32_71, %c4_i32_72, %c0_i32_76] : memref<2x8x128xf32, #tpu.memory_space<vmem>> -> memref<1x1x128xf32, #tpu.memory_space<vmem>>
      %103 = tpu.memref_squeeze %102 : memref<1x1x128xf32, #tpu.memory_space<vmem>> -> memref<128xf32, #tpu.memory_space<vmem>>
      %104 = tpu.memref_slice %arg5[%c0_i32_73, %c4_i32_74] : memref<2x8x!tpu.dma_semaphore, #tpu.memory_space<semaphore_mem>> -> memref<1x1x!tpu.dma_semaphore, #tpu.memory_space<semaphore_mem>>
      %105 = tpu.memref_squeeze %104 : memref<1x1x!tpu.dma_semaphore, #tpu.memory_space<semaphore_mem>> -> memref<!tpu.dma_semaphore, #tpu.memory_space<semaphore_mem>>
      tpu.enqueue_dma source(%101 : memref<128xf32, #tpu.memory_space<any>>) target(%103 : memref<128xf32, #tpu.memory_space<vmem>>) target_semaphore(%105 : memref<!tpu.dma_semaphore, #tpu.memory_space<semaphore_mem>>)
      %c5 = arith.constant 5 : index
      %106 = memref.load %arg1[%c5] : memref<16xi32, #tpu.memory_space<smem>>
      %c0_i32_77 = arith.constant 0 : i32
      %c5_i32_78 = arith.constant 5 : i32
      %c0_i32_79 = arith.constant 0 : i32
      %c5_i32_80 = arith.constant 5 : i32
      %c0_i32_81 = arith.constant 0 : i32
      %107 = tpu.memref_slice %arg2[%106, %c0_i32_81] : memref<100x128xf32, #tpu.memory_space<any>> -> memref<1x128xf32, #tpu.memory_space<any>>
      %108 = tpu.memref_squeeze %107 : memref<1x128xf32, #tpu.memory_space<any>> -> memref<128xf32, #tpu.memory_space<any>>
      %c0_i32_82 = arith.constant 0 : i32
      %109 = tpu.memref_slice %arg4[%c0_i32_77, %c5_i32_78, %c0_i32_82] : memref<2x8x128xf32, #tpu.memory_space<vmem>> -> memref<1x1x128xf32, #tpu.memory_space<vmem>>
      %110 = tpu.memref_squeeze %109 : memref<1x1x128xf32, #tpu.memory_space<vmem>> -> memref<128xf32, #tpu.memory_space<vmem>>
      %111 = tpu.memref_slice %arg5[%c0_i32_79, %c5_i32_80] : memref<2x8x!tpu.dma_semaphore, #tpu.memory_space<semaphore_mem>> -> memref<1x1x!tpu.dma_semaphore, #tpu.memory_space<semaphore_mem>>
      %112 = tpu.memref_squeeze %111 : memref<1x1x!tpu.dma_semaphore, #tpu.memory_space<semaphore_mem>> -> memref<!tpu.dma_semaphore, #tpu.memory_space<semaphore_mem>>
      tpu.enqueue_dma source(%108 : memref<128xf32, #tpu.memory_space<any>>) target(%110 : memref<128xf32, #tpu.memory_space<vmem>>) target_semaphore(%112 : memref<!tpu.dma_semaphore, #tpu.memory_space<semaphore_mem>>)
      %c6 = arith.constant 6 : index
      %113 = memref.load %arg1[%c6] : memref<16xi32, #tpu.memory_space<smem>>
      %c0_i32_83 = arith.constant 0 : i32
      %c6_i32_84 = arith.constant 6 : i32
      %c0_i32_85 = arith.constant 0 : i32
      %c6_i32_86 = arith.constant 6 : i32
      %c0_i32_87 = arith.constant 0 : i32
      %114 = tpu.memref_slice %arg2[%113, %c0_i32_87] : memref<100x128xf32, #tpu.memory_space<any>> -> memref<1x128xf32, #tpu.memory_space<any>>
      %115 = tpu.memref_squeeze %114 : memref<1x128xf32, #tpu.memory_space<any>> -> memref<128xf32, #tpu.memory_space<any>>
      %c0_i32_88 = arith.constant 0 : i32
      %116 = tpu.memref_slice %arg4[%c0_i32_83, %c6_i32_84, %c0_i32_88] : memref<2x8x128xf32, #tpu.memory_space<vmem>> -> memref<1x1x128xf32, #tpu.memory_space<vmem>>
      %117 = tpu.memref_squeeze %116 : memref<1x1x128xf32, #tpu.memory_space<vmem>> -> memref<128xf32, #tpu.memory_space<vmem>>
      %118 = tpu.memref_slice %arg5[%c0_i32_85, %c6_i32_86] : memref<2x8x!tpu.dma_semaphore, #tpu.memory_space<semaphore_mem>> -> memref<1x1x!tpu.dma_semaphore, #tpu.memory_space<semaphore_mem>>
      %119 = tpu.memref_squeeze %118 : memref<1x1x!tpu.dma_semaphore, #tpu.memory_space<semaphore_mem>> -> memref<!tpu.dma_semaphore, #tpu.memory_space<semaphore_mem>>
      tpu.enqueue_dma source(%115 : memref<128xf32, #tpu.memory_space<any>>) target(%117 : memref<128xf32, #tpu.memory_space<vmem>>) target_semaphore(%119 : memref<!tpu.dma_semaphore, #tpu.memory_space<semaphore_mem>>)
      %c7 = arith.constant 7 : index
      %120 = memref.load %arg1[%c7] : memref<16xi32, #tpu.memory_space<smem>>
      %c0_i32_89 = arith.constant 0 : i32
      %c7_i32_90 = arith.constant 7 : i32
      %c0_i32_91 = arith.constant 0 : i32
      %c7_i32_92 = arith.constant 7 : i32
      %c0_i32_93 = arith.constant 0 : i32
      %121 = tpu.memref_slice %arg2[%120, %c0_i32_93] : memref<100x128xf32, #tpu.memory_space<any>> -> memref<1x128xf32, #tpu.memory_space<any>>
      %122 = tpu.memref_squeeze %121 : memref<1x128xf32, #tpu.memory_space<any>> -> memref<128xf32, #tpu.memory_space<any>>
      %c0_i32_94 = arith.constant 0 : i32
      %123 = tpu.memref_slice %arg4[%c0_i32_89, %c7_i32_90, %c0_i32_94] : memref<2x8x128xf32, #tpu.memory_space<vmem>> -> memref<1x1x128xf32, #tpu.memory_space<vmem>>
      %124 = tpu.memref_squeeze %123 : memref<1x1x128xf32, #tpu.memory_space<vmem>> -> memref<128xf32, #tpu.memory_space<vmem>>
      %125 = tpu.memref_slice %arg5[%c0_i32_91, %c7_i32_92] : memref<2x8x!tpu.dma_semaphore, #tpu.memory_space<semaphore_mem>> -> memref<1x1x!tpu.dma_semaphore, #tpu.memory_space<semaphore_mem>>
      %126 = tpu.memref_squeeze %125 : memref<1x1x!tpu.dma_semaphore, #tpu.memory_space<semaphore_mem>> -> memref<!tpu.dma_semaphore, #tpu.memory_space<semaphore_mem>>
      tpu.enqueue_dma source(%122 : memref<128xf32, #tpu.memory_space<any>>) target(%124 : memref<128xf32, #tpu.memory_space<vmem>>) target_semaphore(%126 : memref<!tpu.dma_semaphore, #tpu.memory_space<semaphore_mem>>)
    } else {
    }
    %c1_i32 = arith.constant 1 : i32
    %3 = arith.addi %arg0, %c1_i32 : i32
    %c2_i32 = arith.constant 2 : i32
    %4 = arith.cmpi slt, %3, %c2_i32 : i32
    %5 = arith.extui %4 : i1 to i32
    %c0_i32_1 = arith.constant 0 : i32
    %6 = arith.cmpi ne, %5, %c0_i32_1 : i32
    scf.if %6 {
      %c1_i32_46 = arith.constant 1 : i32
      %71 = arith.addi %arg0, %c1_i32_46 : i32
      %c1_i32_47 = arith.constant 1 : i32
      %72 = arith.addi %arg0, %c1_i32_47 : i32
      %c2_i32_48 = arith.constant 2 : i32
      %c0_i32_49 = arith.constant 0 : i32
      %73 = arith.cmpi eq, %c2_i32_48, %c0_i32_49 : i32
      %c1_i32_50 = arith.constant 1 : i32
      %74 = arith.select %73, %c1_i32_50, %c2_i32_48 : i32
      %75 = arith.remsi %72, %74 : i32
      %c0_i32_51 = arith.constant 0 : i32
      %76 = arith.cmpi ne, %75, %c0_i32_51 : i32
      %c0_i32_52 = arith.constant 0 : i32
      %77 = arith.cmpi slt, %75, %c0_i32_52 : i32
      %c0_i32_53 = arith.constant 0 : i32
      %78 = arith.cmpi slt, %74, %c0_i32_53 : i32
      %79 = arith.xori %77, %78 : i1
      %80 = arith.andi %79, %76 : i1
      %81 = arith.addi %75, %74 : i32
      %82 = arith.select %80, %81, %75 : i32
      %c8_i32 = arith.constant 8 : i32
      %83 = arith.muli %71, %c8_i32 : i32
      %c0_i32_54 = arith.constant 0 : i32
      %84 = arith.addi %83, %c0_i32_54 : i32
      %85 = arith.index_cast %84 : i32 to index
      %86 = memref.load %arg1[%85] : memref<16xi32, #tpu.memory_space<smem>>
      %c0_i32_55 = arith.constant 0 : i32
      %c0_i32_56 = arith.constant 0 : i32
      %c0_i32_57 = arith.constant 0 : i32
      %87 = tpu.memref_slice %arg2[%86, %c0_i32_57] : memref<100x128xf32, #tpu.memory_space<any>> -> memref<1x128xf32, #tpu.memory_space<any>>
      %88 = tpu.memref_squeeze %87 : memref<1x128xf32, #tpu.memory_space<any>> -> memref<128xf32, #tpu.memory_space<any>>
      %c0_i32_58 = arith.constant 0 : i32
      %89 = tpu.memref_slice %arg4[%82, %c0_i32_55, %c0_i32_58] : memref<2x8x128xf32, #tpu.memory_space<vmem>> -> memref<1x1x128xf32, #tpu.memory_space<vmem>>
      %90 = tpu.memref_squeeze %89 : memref<1x1x128xf32, #tpu.memory_space<vmem>> -> memref<128xf32, #tpu.memory_space<vmem>>
      %91 = tpu.memref_slice %arg5[%82, %c0_i32_56] : memref<2x8x!tpu.dma_semaphore, #tpu.memory_space<semaphore_mem>> -> memref<1x1x!tpu.dma_semaphore, #tpu.memory_space<semaphore_mem>>
      %92 = tpu.memref_squeeze %91 : memref<1x1x!tpu.dma_semaphore, #tpu.memory_space<semaphore_mem>> -> memref<!tpu.dma_semaphore, #tpu.memory_space<semaphore_mem>>
      tpu.enqueue_dma source(%88 : memref<128xf32, #tpu.memory_space<any>>) target(%90 : memref<128xf32, #tpu.memory_space<vmem>>) target_semaphore(%92 : memref<!tpu.dma_semaphore, #tpu.memory_space<semaphore_mem>>)
      %c1_i32_59 = arith.constant 1 : i32
      %93 = arith.addi %83, %c1_i32_59 : i32
      %94 = arith.index_cast %93 : i32 to index
      %95 = memref.load %arg1[%94] : memref<16xi32, #tpu.memory_space<smem>>
      %c1_i32_60 = arith.constant 1 : i32
      %c1_i32_61 = arith.constant 1 : i32
      %c0_i32_62 = arith.constant 0 : i32
      %96 = tpu.memref_slice %arg2[%95, %c0_i32_62] : memref<100x128xf32, #tpu.memory_space<any>> -> memref<1x128xf32, #tpu.memory_space<any>>
      %97 = tpu.memref_squeeze %96 : memref<1x128xf32, #tpu.memory_space<any>> -> memref<128xf32, #tpu.memory_space<any>>
      %c0_i32_63 = arith.constant 0 : i32
      %98 = tpu.memref_slice %arg4[%82, %c1_i32_60, %c0_i32_63] : memref<2x8x128xf32, #tpu.memory_space<vmem>> -> memref<1x1x128xf32, #tpu.memory_space<vmem>>
      %99 = tpu.memref_squeeze %98 : memref<1x1x128xf32, #tpu.memory_space<vmem>> -> memref<128xf32, #tpu.memory_space<vmem>>
      %100 = tpu.memref_slice %arg5[%82, %c1_i32_61] : memref<2x8x!tpu.dma_semaphore, #tpu.memory_space<semaphore_mem>> -> memref<1x1x!tpu.dma_semaphore, #tpu.memory_space<semaphore_mem>>
      %101 = tpu.memref_squeeze %100 : memref<1x1x!tpu.dma_semaphore, #tpu.memory_space<semaphore_mem>> -> memref<!tpu.dma_semaphore, #tpu.memory_space<semaphore_mem>>
      tpu.enqueue_dma source(%97 : memref<128xf32, #tpu.memory_space<any>>) target(%99 : memref<128xf32, #tpu.memory_space<vmem>>) target_semaphore(%101 : memref<!tpu.dma_semaphore, #tpu.memory_space<semaphore_mem>>)
      %c2_i32_64 = arith.constant 2 : i32
      %102 = arith.addi %83, %c2_i32_64 : i32
      %103 = arith.index_cast %102 : i32 to index
      %104 = memref.load %arg1[%103] : memref<16xi32, #tpu.memory_space<smem>>
      %c2_i32_65 = arith.constant 2 : i32
      %c2_i32_66 = arith.constant 2 : i32
      %c0_i32_67 = arith.constant 0 : i32
      %105 = tpu.memref_slice %arg2[%104, %c0_i32_67] : memref<100x128xf32, #tpu.memory_space<any>> -> memref<1x128xf32, #tpu.memory_space<any>>
      %106 = tpu.memref_squeeze %105 : memref<1x128xf32, #tpu.memory_space<any>> -> memref<128xf32, #tpu.memory_space<any>>
      %c0_i32_68 = arith.constant 0 : i32
      %107 = tpu.memref_slice %arg4[%82, %c2_i32_65, %c0_i32_68] : memref<2x8x128xf32, #tpu.memory_space<vmem>> -> memref<1x1x128xf32, #tpu.memory_space<vmem>>
      %108 = tpu.memref_squeeze %107 : memref<1x1x128xf32, #tpu.memory_space<vmem>> -> memref<128xf32, #tpu.memory_space<vmem>>
      %109 = tpu.memref_slice %arg5[%82, %c2_i32_66] : memref<2x8x!tpu.dma_semaphore, #tpu.memory_space<semaphore_mem>> -> memref<1x1x!tpu.dma_semaphore, #tpu.memory_space<semaphore_mem>>
      %110 = tpu.memref_squeeze %109 : memref<1x1x!tpu.dma_semaphore, #tpu.memory_space<semaphore_mem>> -> memref<!tpu.dma_semaphore, #tpu.memory_space<semaphore_mem>>
      tpu.enqueue_dma source(%106 : memref<128xf32, #tpu.memory_space<any>>) target(%108 : memref<128xf32, #tpu.memory_space<vmem>>) target_semaphore(%110 : memref<!tpu.dma_semaphore, #tpu.memory_space<semaphore_mem>>)
      %c3_i32_69 = arith.constant 3 : i32
      %111 = arith.addi %83, %c3_i32_69 : i32
      %112 = arith.index_cast %111 : i32 to index
      %113 = memref.load %arg1[%112] : memref<16xi32, #tpu.memory_space<smem>>
      %c3_i32_70 = arith.constant 3 : i32
      %c3_i32_71 = arith.constant 3 : i32
      %c0_i32_72 = arith.constant 0 : i32
      %114 = tpu.memref_slice %arg2[%113, %c0_i32_72] : memref<100x128xf32, #tpu.memory_space<any>> -> memref<1x128xf32, #tpu.memory_space<any>>
      %115 = tpu.memref_squeeze %114 : memref<1x128xf32, #tpu.memory_space<any>> -> memref<128xf32, #tpu.memory_space<any>>
      %c0_i32_73 = arith.constant 0 : i32
      %116 = tpu.memref_slice %arg4[%82, %c3_i32_70, %c0_i32_73] : memref<2x8x128xf32, #tpu.memory_space<vmem>> -> memref<1x1x128xf32, #tpu.memory_space<vmem>>
      %117 = tpu.memref_squeeze %116 : memref<1x1x128xf32, #tpu.memory_space<vmem>> -> memref<128xf32, #tpu.memory_space<vmem>>
      %118 = tpu.memref_slice %arg5[%82, %c3_i32_71] : memref<2x8x!tpu.dma_semaphore, #tpu.memory_space<semaphore_mem>> -> memref<1x1x!tpu.dma_semaphore, #tpu.memory_space<semaphore_mem>>
      %119 = tpu.memref_squeeze %118 : memref<1x1x!tpu.dma_semaphore, #tpu.memory_space<semaphore_mem>> -> memref<!tpu.dma_semaphore, #tpu.memory_space<semaphore_mem>>
      tpu.enqueue_dma source(%115 : memref<128xf32, #tpu.memory_space<any>>) target(%117 : memref<128xf32, #tpu.memory_space<vmem>>) target_semaphore(%119 : memref<!tpu.dma_semaphore, #tpu.memory_space<semaphore_mem>>)
      %c4_i32_74 = arith.constant 4 : i32
      %120 = arith.addi %83, %c4_i32_74 : i32
      %121 = arith.index_cast %120 : i32 to index
      %122 = memref.load %arg1[%121] : memref<16xi32, #tpu.memory_space<smem>>
      %c4_i32_75 = arith.constant 4 : i32
      %c4_i32_76 = arith.constant 4 : i32
      %c0_i32_77 = arith.constant 0 : i32
      %123 = tpu.memref_slice %arg2[%122, %c0_i32_77] : memref<100x128xf32, #tpu.memory_space<any>> -> memref<1x128xf32, #tpu.memory_space<any>>
      %124 = tpu.memref_squeeze %123 : memref<1x128xf32, #tpu.memory_space<any>> -> memref<128xf32, #tpu.memory_space<any>>
      %c0_i32_78 = arith.constant 0 : i32
      %125 = tpu.memref_slice %arg4[%82, %c4_i32_75, %c0_i32_78] : memref<2x8x128xf32, #tpu.memory_space<vmem>> -> memref<1x1x128xf32, #tpu.memory_space<vmem>>
      %126 = tpu.memref_squeeze %125 : memref<1x1x128xf32, #tpu.memory_space<vmem>> -> memref<128xf32, #tpu.memory_space<vmem>>
      %127 = tpu.memref_slice %arg5[%82, %c4_i32_76] : memref<2x8x!tpu.dma_semaphore, #tpu.memory_space<semaphore_mem>> -> memref<1x1x!tpu.dma_semaphore, #tpu.memory_space<semaphore_mem>>
      %128 = tpu.memref_squeeze %127 : memref<1x1x!tpu.dma_semaphore, #tpu.memory_space<semaphore_mem>> -> memref<!tpu.dma_semaphore, #tpu.memory_space<semaphore_mem>>
      tpu.enqueue_dma source(%124 : memref<128xf32, #tpu.memory_space<any>>) target(%126 : memref<128xf32, #tpu.memory_space<vmem>>) target_semaphore(%128 : memref<!tpu.dma_semaphore, #tpu.memory_space<semaphore_mem>>)
      %c5_i32_79 = arith.constant 5 : i32
      %129 = arith.addi %83, %c5_i32_79 : i32
      %130 = arith.index_cast %129 : i32 to index
      %131 = memref.load %arg1[%130] : memref<16xi32, #tpu.memory_space<smem>>
      %c5_i32_80 = arith.constant 5 : i32
      %c5_i32_81 = arith.constant 5 : i32
      %c0_i32_82 = arith.constant 0 : i32
      %132 = tpu.memref_slice %arg2[%131, %c0_i32_82] : memref<100x128xf32, #tpu.memory_space<any>> -> memref<1x128xf32, #tpu.memory_space<any>>
      %133 = tpu.memref_squeeze %132 : memref<1x128xf32, #tpu.memory_space<any>> -> memref<128xf32, #tpu.memory_space<any>>
      %c0_i32_83 = arith.constant 0 : i32
      %134 = tpu.memref_slice %arg4[%82, %c5_i32_80, %c0_i32_83] : memref<2x8x128xf32, #tpu.memory_space<vmem>> -> memref<1x1x128xf32, #tpu.memory_space<vmem>>
      %135 = tpu.memref_squeeze %134 : memref<1x1x128xf32, #tpu.memory_space<vmem>> -> memref<128xf32, #tpu.memory_space<vmem>>
      %136 = tpu.memref_slice %arg5[%82, %c5_i32_81] : memref<2x8x!tpu.dma_semaphore, #tpu.memory_space<semaphore_mem>> -> memref<1x1x!tpu.dma_semaphore, #tpu.memory_space<semaphore_mem>>
      %137 = tpu.memref_squeeze %136 : memref<1x1x!tpu.dma_semaphore, #tpu.memory_space<semaphore_mem>> -> memref<!tpu.dma_semaphore, #tpu.memory_space<semaphore_mem>>
      tpu.enqueue_dma source(%133 : memref<128xf32, #tpu.memory_space<any>>) target(%135 : memref<128xf32, #tpu.memory_space<vmem>>) target_semaphore(%137 : memref<!tpu.dma_semaphore, #tpu.memory_space<semaphore_mem>>)
      %c6_i32_84 = arith.constant 6 : i32
      %138 = arith.addi %83, %c6_i32_84 : i32
      %139 = arith.index_cast %138 : i32 to index
      %140 = memref.load %arg1[%139] : memref<16xi32, #tpu.memory_space<smem>>
      %c6_i32_85 = arith.constant 6 : i32
      %c6_i32_86 = arith.constant 6 : i32
      %c0_i32_87 = arith.constant 0 : i32
      %141 = tpu.memref_slice %arg2[%140, %c0_i32_87] : memref<100x128xf32, #tpu.memory_space<any>> -> memref<1x128xf32, #tpu.memory_space<any>>
      %142 = tpu.memref_squeeze %141 : memref<1x128xf32, #tpu.memory_space<any>> -> memref<128xf32, #tpu.memory_space<any>>
      %c0_i32_88 = arith.constant 0 : i32
      %143 = tpu.memref_slice %arg4[%82, %c6_i32_85, %c0_i32_88] : memref<2x8x128xf32, #tpu.memory_space<vmem>> -> memref<1x1x128xf32, #tpu.memory_space<vmem>>
      %144 = tpu.memref_squeeze %143 : memref<1x1x128xf32, #tpu.memory_space<vmem>> -> memref<128xf32, #tpu.memory_space<vmem>>
      %145 = tpu.memref_slice %arg5[%82, %c6_i32_86] : memref<2x8x!tpu.dma_semaphore, #tpu.memory_space<semaphore_mem>> -> memref<1x1x!tpu.dma_semaphore, #tpu.memory_space<semaphore_mem>>
      %146 = tpu.memref_squeeze %145 : memref<1x1x!tpu.dma_semaphore, #tpu.memory_space<semaphore_mem>> -> memref<!tpu.dma_semaphore, #tpu.memory_space<semaphore_mem>>
      tpu.enqueue_dma source(%142 : memref<128xf32, #tpu.memory_space<any>>) target(%144 : memref<128xf32, #tpu.memory_space<vmem>>) target_semaphore(%146 : memref<!tpu.dma_semaphore, #tpu.memory_space<semaphore_mem>>)
      %c7_i32_89 = arith.constant 7 : i32
      %147 = arith.addi %83, %c7_i32_89 : i32
      %148 = arith.index_cast %147 : i32 to index
      %149 = memref.load %arg1[%148] : memref<16xi32, #tpu.memory_space<smem>>
      %c7_i32_90 = arith.constant 7 : i32
      %c7_i32_91 = arith.constant 7 : i32
      %c0_i32_92 = arith.constant 0 : i32
      %150 = tpu.memref_slice %arg2[%149, %c0_i32_92] : memref<100x128xf32, #tpu.memory_space<any>> -> memref<1x128xf32, #tpu.memory_space<any>>
      %151 = tpu.memref_squeeze %150 : memref<1x128xf32, #tpu.memory_space<any>> -> memref<128xf32, #tpu.memory_space<any>>
      %c0_i32_93 = arith.constant 0 : i32
      %152 = tpu.memref_slice %arg4[%82, %c7_i32_90, %c0_i32_93] : memref<2x8x128xf32, #tpu.memory_space<vmem>> -> memref<1x1x128xf32, #tpu.memory_space<vmem>>
      %153 = tpu.memref_squeeze %152 : memref<1x1x128xf32, #tpu.memory_space<vmem>> -> memref<128xf32, #tpu.memory_space<vmem>>
      %154 = tpu.memref_slice %arg5[%82, %c7_i32_91] : memref<2x8x!tpu.dma_semaphore, #tpu.memory_space<semaphore_mem>> -> memref<1x1x!tpu.dma_semaphore, #tpu.memory_space<semaphore_mem>>
      %155 = tpu.memref_squeeze %154 : memref<1x1x!tpu.dma_semaphore, #tpu.memory_space<semaphore_mem>> -> memref<!tpu.dma_semaphore, #tpu.memory_space<semaphore_mem>>
      tpu.enqueue_dma source(%151 : memref<128xf32, #tpu.memory_space<any>>) target(%153 : memref<128xf32, #tpu.memory_space<vmem>>) target_semaphore(%155 : memref<!tpu.dma_semaphore, #tpu.memory_space<semaphore_mem>>)
    } else {
    }
    %c2_i32_2 = arith.constant 2 : i32
    %c0_i32_3 = arith.constant 0 : i32
    %7 = arith.cmpi eq, %c2_i32_2, %c0_i32_3 : i32
    %c1_i32_4 = arith.constant 1 : i32
    %8 = arith.select %7, %c1_i32_4, %c2_i32_2 : i32
    %9 = arith.remsi %arg0, %8 : i32
    %c0_i32_5 = arith.constant 0 : i32
    %10 = arith.cmpi ne, %9, %c0_i32_5 : i32
    %c0_i32_6 = arith.constant 0 : i32
    %11 = arith.cmpi slt, %9, %c0_i32_6 : i32
    %c0_i32_7 = arith.constant 0 : i32
    %12 = arith.cmpi slt, %8, %c0_i32_7 : i32
    %13 = arith.xori %11, %12 : i1
    %14 = arith.andi %13, %10 : i1
    %15 = arith.addi %9, %8 : i32
    %16 = arith.select %14, %15, %9 : i32
    %c0_i32_8 = arith.constant 0 : i32
    %c0_i32_9 = arith.constant 0 : i32
    %c0_i32_10 = arith.constant 0 : i32
    %c0_i32_11 = arith.constant 0 : i32
    %17 = tpu.memref_slice %arg2[%c0_i32_8, %c0_i32_11] : memref<100x128xf32, #tpu.memory_space<any>> -> memref<1x128xf32, #tpu.memory_space<any>>
    %18 = tpu.memref_squeeze %17 : memref<1x128xf32, #tpu.memory_space<any>> -> memref<128xf32, #tpu.memory_space<any>>
    %c0_i32_12 = arith.constant 0 : i32
    %19 = tpu.memref_slice %arg4[%16, %c0_i32_9, %c0_i32_12] : memref<2x8x128xf32, #tpu.memory_space<vmem>> -> memref<1x1x128xf32, #tpu.memory_space<vmem>>
    %20 = tpu.memref_squeeze %19 : memref<1x1x128xf32, #tpu.memory_space<vmem>> -> memref<128xf32, #tpu.memory_space<vmem>>
    %21 = tpu.memref_slice %arg5[%16, %c0_i32_10] : memref<2x8x!tpu.dma_semaphore, #tpu.memory_space<semaphore_mem>> -> memref<1x1x!tpu.dma_semaphore, #tpu.memory_space<semaphore_mem>>
    %22 = tpu.memref_squeeze %21 : memref<1x1x!tpu.dma_semaphore, #tpu.memory_space<semaphore_mem>> -> memref<!tpu.dma_semaphore, #tpu.memory_space<semaphore_mem>>
    tpu.wait_dma2 semaphore(%22 : memref<!tpu.dma_semaphore, #tpu.memory_space<semaphore_mem>>) src(%18 : memref<128xf32, #tpu.memory_space<any>>) dst(%20 : memref<128xf32, #tpu.memory_space<vmem>>)
    %c0_i32_13 = arith.constant 0 : i32
    %c1_i32_14 = arith.constant 1 : i32
    %c1_i32_15 = arith.constant 1 : i32
    %c0_i32_16 = arith.constant 0 : i32
    %23 = tpu.memref_slice %arg2[%c0_i32_13, %c0_i32_16] : memref<100x128xf32, #tpu.memory_space<any>> -> memref<1x128xf32, #tpu.memory_space<any>>
    %24 = tpu.memref_squeeze %23 : memref<1x128xf32, #tpu.memory_space<any>> -> memref<128xf32, #tpu.memory_space<any>>
    %c0_i32_17 = arith.constant 0 : i32
    %25 = tpu.memref_slice %arg4[%16, %c1_i32_14, %c0_i32_17] : memref<2x8x128xf32, #tpu.memory_space<vmem>> -> memref<1x1x128xf32, #tpu.memory_space<vmem>>
    %26 = tpu.memref_squeeze %25 : memref<1x1x128xf32, #tpu.memory_space<vmem>> -> memref<128xf32, #tpu.memory_space<vmem>>
    %27 = tpu.memref_slice %arg5[%16, %c1_i32_15] : memref<2x8x!tpu.dma_semaphore, #tpu.memory_space<semaphore_mem>> -> memref<1x1x!tpu.dma_semaphore, #tpu.memory_space<semaphore_mem>>
    %28 = tpu.memref_squeeze %27 : memref<1x1x!tpu.dma_semaphore, #tpu.memory_space<semaphore_mem>> -> memref<!tpu.dma_semaphore, #tpu.memory_space<semaphore_mem>>
    tpu.wait_dma2 semaphore(%28 : memref<!tpu.dma_semaphore, #tpu.memory_space<semaphore_mem>>) src(%24 : memref<128xf32, #tpu.memory_space<any>>) dst(%26 : memref<128xf32, #tpu.memory_space<vmem>>)
    %c0_i32_18 = arith.constant 0 : i32
    %c2_i32_19 = arith.constant 2 : i32
    %c2_i32_20 = arith.constant 2 : i32
    %c0_i32_21 = arith.constant 0 : i32
    %29 = tpu.memref_slice %arg2[%c0_i32_18, %c0_i32_21] : memref<100x128xf32, #tpu.memory_space<any>> -> memref<1x128xf32, #tpu.memory_space<any>>
    %30 = tpu.memref_squeeze %29 : memref<1x128xf32, #tpu.memory_space<any>> -> memref<128xf32, #tpu.memory_space<any>>
    %c0_i32_22 = arith.constant 0 : i32
    %31 = tpu.memref_slice %arg4[%16, %c2_i32_19, %c0_i32_22] : memref<2x8x128xf32, #tpu.memory_space<vmem>> -> memref<1x1x128xf32, #tpu.memory_space<vmem>>
    %32 = tpu.memref_squeeze %31 : memref<1x1x128xf32, #tpu.memory_space<vmem>> -> memref<128xf32, #tpu.memory_space<vmem>>
    %33 = tpu.memref_slice %arg5[%16, %c2_i32_20] : memref<2x8x!tpu.dma_semaphore, #tpu.memory_space<semaphore_mem>> -> memref<1x1x!tpu.dma_semaphore, #tpu.memory_space<semaphore_mem>>
    %34 = tpu.memref_squeeze %33 : memref<1x1x!tpu.dma_semaphore, #tpu.memory_space<semaphore_mem>> -> memref<!tpu.dma_semaphore, #tpu.memory_space<semaphore_mem>>
    tpu.wait_dma2 semaphore(%34 : memref<!tpu.dma_semaphore, #tpu.memory_space<semaphore_mem>>) src(%30 : memref<128xf32, #tpu.memory_space<any>>) dst(%32 : memref<128xf32, #tpu.memory_space<vmem>>)
    %c0_i32_23 = arith.constant 0 : i32
    %c3_i32 = arith.constant 3 : i32
    %c3_i32_24 = arith.constant 3 : i32
    %c0_i32_25 = arith.constant 0 : i32
    %35 = tpu.memref_slice %arg2[%c0_i32_23, %c0_i32_25] : memref<100x128xf32, #tpu.memory_space<any>> -> memref<1x128xf32, #tpu.memory_space<any>>
    %36 = tpu.memref_squeeze %35 : memref<1x128xf32, #tpu.memory_space<any>> -> memref<128xf32, #tpu.memory_space<any>>
    %c0_i32_26 = arith.constant 0 : i32
    %37 = tpu.memref_slice %arg4[%16, %c3_i32, %c0_i32_26] : memref<2x8x128xf32, #tpu.memory_space<vmem>> -> memref<1x1x128xf32, #tpu.memory_space<vmem>>
    %38 = tpu.memref_squeeze %37 : memref<1x1x128xf32, #tpu.memory_space<vmem>> -> memref<128xf32, #tpu.memory_space<vmem>>
    %39 = tpu.memref_slice %arg5[%16, %c3_i32_24] : memref<2x8x!tpu.dma_semaphore, #tpu.memory_space<semaphore_mem>> -> memref<1x1x!tpu.dma_semaphore, #tpu.memory_space<semaphore_mem>>
    %40 = tpu.memref_squeeze %39 : memref<1x1x!tpu.dma_semaphore, #tpu.memory_space<semaphore_mem>> -> memref<!tpu.dma_semaphore, #tpu.memory_space<semaphore_mem>>
    tpu.wait_dma2 semaphore(%40 : memref<!tpu.dma_semaphore, #tpu.memory_space<semaphore_mem>>) src(%36 : memref<128xf32, #tpu.memory_space<any>>) dst(%38 : memref<128xf32, #tpu.memory_space<vmem>>)
    %c0_i32_27 = arith.constant 0 : i32
    %c4_i32 = arith.constant 4 : i32
    %c4_i32_28 = arith.constant 4 : i32
    %c0_i32_29 = arith.constant 0 : i32
    %41 = tpu.memref_slice %arg2[%c0_i32_27, %c0_i32_29] : memref<100x128xf32, #tpu.memory_space<any>> -> memref<1x128xf32, #tpu.memory_space<any>>
    %42 = tpu.memref_squeeze %41 : memref<1x128xf32, #tpu.memory_space<any>> -> memref<128xf32, #tpu.memory_space<any>>
    %c0_i32_30 = arith.constant 0 : i32
    %43 = tpu.memref_slice %arg4[%16, %c4_i32, %c0_i32_30] : memref<2x8x128xf32, #tpu.memory_space<vmem>> -> memref<1x1x128xf32, #tpu.memory_space<vmem>>
    %44 = tpu.memref_squeeze %43 : memref<1x1x128xf32, #tpu.memory_space<vmem>> -> memref<128xf32, #tpu.memory_space<vmem>>
    %45 = tpu.memref_slice %arg5[%16, %c4_i32_28] : memref<2x8x!tpu.dma_semaphore, #tpu.memory_space<semaphore_mem>> -> memref<1x1x!tpu.dma_semaphore, #tpu.memory_space<semaphore_mem>>
    %46 = tpu.memref_squeeze %45 : memref<1x1x!tpu.dma_semaphore, #tpu.memory_space<semaphore_mem>> -> memref<!tpu.dma_semaphore, #tpu.memory_space<semaphore_mem>>
    tpu.wait_dma2 semaphore(%46 : memref<!tpu.dma_semaphore, #tpu.memory_space<semaphore_mem>>) src(%42 : memref<128xf32, #tpu.memory_space<any>>) dst(%44 : memref<128xf32, #tpu.memory_space<vmem>>)
    %c0_i32_31 = arith.constant 0 : i32
    %c5_i32 = arith.constant 5 : i32
    %c5_i32_32 = arith.constant 5 : i32
    %c0_i32_33 = arith.constant 0 : i32
    %47 = tpu.memref_slice %arg2[%c0_i32_31, %c0_i32_33] : memref<100x128xf32, #tpu.memory_space<any>> -> memref<1x128xf32, #tpu.memory_space<any>>
    %48 = tpu.memref_squeeze %47 : memref<1x128xf32, #tpu.memory_space<any>> -> memref<128xf32, #tpu.memory_space<any>>
    %c0_i32_34 = arith.constant 0 : i32
    %49 = tpu.memref_slice %arg4[%16, %c5_i32, %c0_i32_34] : memref<2x8x128xf32, #tpu.memory_space<vmem>> -> memref<1x1x128xf32, #tpu.memory_space<vmem>>
    %50 = tpu.memref_squeeze %49 : memref<1x1x128xf32, #tpu.memory_space<vmem>> -> memref<128xf32, #tpu.memory_space<vmem>>
    %51 = tpu.memref_slice %arg5[%16, %c5_i32_32] : memref<2x8x!tpu.dma_semaphore, #tpu.memory_space<semaphore_mem>> -> memref<1x1x!tpu.dma_semaphore, #tpu.memory_space<semaphore_mem>>
    %52 = tpu.memref_squeeze %51 : memref<1x1x!tpu.dma_semaphore, #tpu.memory_space<semaphore_mem>> -> memref<!tpu.dma_semaphore, #tpu.memory_space<semaphore_mem>>
    tpu.wait_dma2 semaphore(%52 : memref<!tpu.dma_semaphore, #tpu.memory_space<semaphore_mem>>) src(%48 : memref<128xf32, #tpu.memory_space<any>>) dst(%50 : memref<128xf32, #tpu.memory_space<vmem>>)
    %c0_i32_35 = arith.constant 0 : i32
    %c6_i32 = arith.constant 6 : i32
    %c6_i32_36 = arith.constant 6 : i32
    %c0_i32_37 = arith.constant 0 : i32
    %53 = tpu.memref_slice %arg2[%c0_i32_35, %c0_i32_37] : memref<100x128xf32, #tpu.memory_space<any>> -> memref<1x128xf32, #tpu.memory_space<any>>
    %54 = tpu.memref_squeeze %53 : memref<1x128xf32, #tpu.memory_space<any>> -> memref<128xf32, #tpu.memory_space<any>>
    %c0_i32_38 = arith.constant 0 : i32
    %55 = tpu.memref_slice %arg4[%16, %c6_i32, %c0_i32_38] : memref<2x8x128xf32, #tpu.memory_space<vmem>> -> memref<1x1x128xf32, #tpu.memory_space<vmem>>
    %56 = tpu.memref_squeeze %55 : memref<1x1x128xf32, #tpu.memory_space<vmem>> -> memref<128xf32, #tpu.memory_space<vmem>>
    %57 = tpu.memref_slice %arg5[%16, %c6_i32_36] : memref<2x8x!tpu.dma_semaphore, #tpu.memory_space<semaphore_mem>> -> memref<1x1x!tpu.dma_semaphore, #tpu.memory_space<semaphore_mem>>
    %58 = tpu.memref_squeeze %57 : memref<1x1x!tpu.dma_semaphore, #tpu.memory_space<semaphore_mem>> -> memref<!tpu.dma_semaphore, #tpu.memory_space<semaphore_mem>>
    tpu.wait_dma2 semaphore(%58 : memref<!tpu.dma_semaphore, #tpu.memory_space<semaphore_mem>>) src(%54 : memref<128xf32, #tpu.memory_space<any>>) dst(%56 : memref<128xf32, #tpu.memory_space<vmem>>)
    %c0_i32_39 = arith.constant 0 : i32
    %c7_i32 = arith.constant 7 : i32
    %c7_i32_40 = arith.constant 7 : i32
    %c0_i32_41 = arith.constant 0 : i32
    %59 = tpu.memref_slice %arg2[%c0_i32_39, %c0_i32_41] : memref<100x128xf32, #tpu.memory_space<any>> -> memref<1x128xf32, #tpu.memory_space<any>>
    %60 = tpu.memref_squeeze %59 : memref<1x128xf32, #tpu.memory_space<any>> -> memref<128xf32, #tpu.memory_space<any>>
    %c0_i32_42 = arith.constant 0 : i32
    %61 = tpu.memref_slice %arg4[%16, %c7_i32, %c0_i32_42] : memref<2x8x128xf32, #tpu.memory_space<vmem>> -> memref<1x1x128xf32, #tpu.memory_space<vmem>>
    %62 = tpu.memref_squeeze %61 : memref<1x1x128xf32, #tpu.memory_space<vmem>> -> memref<128xf32, #tpu.memory_space<vmem>>
    %63 = tpu.memref_slice %arg5[%16, %c7_i32_40] : memref<2x8x!tpu.dma_semaphore, #tpu.memory_space<semaphore_mem>> -> memref<1x1x!tpu.dma_semaphore, #tpu.memory_space<semaphore_mem>>
    %64 = tpu.memref_squeeze %63 : memref<1x1x!tpu.dma_semaphore, #tpu.memory_space<semaphore_mem>> -> memref<!tpu.dma_semaphore, #tpu.memory_space<semaphore_mem>>
    tpu.wait_dma2 semaphore(%64 : memref<!tpu.dma_semaphore, #tpu.memory_space<semaphore_mem>>) src(%60 : memref<128xf32, #tpu.memory_space<any>>) dst(%62 : memref<128xf32, #tpu.memory_space<vmem>>)
    %65 = arith.index_cast %16 : i32 to index
    %c0 = arith.constant 0 : index
    %c0_43 = arith.constant 0 : index
    %66 = vector.load %arg4[%65, %c0, %c0_43] : memref<2x8x128xf32, #tpu.memory_space<vmem>>, vector<1x8x128xf32>
    %67 = vector.shape_cast %66 : vector<1x8x128xf32> to vector<8x128xf32>
    %cst = arith.constant 11.3137083 : f32
    %68 = vector.broadcast %cst : f32 to vector<8x128xf32>
    %69 = arith.mulf %67, %68 : vector<8x128xf32>
    %c0_44 = arith.constant 0 : index
    %c0_45 = arith.constant 0 : index
    %70 = vector.load %arg3[%c0_44, %c0_45] : memref<8x128xf32, #tpu.memory_space<vmem>>, vector<8x128xf32>
    tpu.vector_store %arg3[%c0_44, %c0_45], %69 {strides = array<i32>} : memref<8x128xf32, #tpu.memory_space<vmem>>, vector<8x128xf32>,
    return
  }
  func.func @transform_1(%arg0: i32, %arg1: memref<16xi32, #tpu.memory_space<smem>>) -> (i32, i32) {
    %c0_i32 = arith.constant 0 : i32
    %c0_i32_0 = arith.constant 0 : i32
    return %arg0, %c0_i32 : i32, i32
  }
}

</mosaic_0001>

<llo_original>
// kernel: tpu_custom_call.1
$region0: #{tpu_custom_call.1}
  #allocation0 [shape = 'u32[]', space=smem, size = 0x4, offset = 0x4, fixed_abs, tag = 'smem constant byte address 0x4 - core index']
  #allocation1 [shape = 'u32[72,128]{1,0:T(1,128)}', space=vmem, size = 0x9000, scoped, tag = 'internal scratch']
  #allocation2 [shape = 'f32[2,8,128]{2,1,0:T(8,128)}', space=vmem, size = 0x2000, scoped, tag = 'scratch operand']
  #allocation3 [shape = 's32[16]{0}', space=sflag, size = 0x40, scoped, tag = 'scratch operand']
  #allocation4 [shape = 's32[1]{0}', space=sflag, size = 0x4, scoped, tag = 'scoped memory for tpu_custom_call.1']
  #allocation5 [shape = 'u8[512]{0}', space=smem, size = 0x200, scoped, tag = 'prefetched SMEM operand 0']
  #allocation8 [shape = 's32[]', space=sflag, size = 0x4, offset = 0, fixed_abs, tag = 'sflag constant byte address 0x0 - dummy sync flag']
  #allocation9 [shape = 's32[]', space=sflag, size = 0x4, offset = 0, fixed_abs, tag = 'sflag constant byte address 0x0 - dummy sync flag']
  #allocation10 [shape = 'u32[]', space=smem, size = 0x4, offset = 0x44, fixed_abs, tag = 'smem constant byte address 0x44 - assertion arg 0']
  #allocation11 [shape = 'u32[]', space=smem, size = 0x4, offset = 0x48, fixed_abs, tag = 'smem constant byte address 0x48 - assertion arg 1']
  #allocation12 [shape = 's32[]', space=sflag, size = 0x4, offset = 0, fixed_abs, tag = 'sflag constant byte address 0x0 - dummy sync flag']
  #allocation13 [shape = 's32[]', space=sflag, size = 0x4, offset = 0, fixed_abs, tag = 'sflag constant byte address 0x0 - dummy sync flag']
  #allocation14 [shape = 's32[]', space=sflag, size = 0x4, offset = 0, fixed_abs, tag = 'sflag constant byte address 0x0 - dummy sync flag']
  #allocation15 [shape = 's32[]', space=sflag, size = 0x4, offset = 0, fixed_abs, tag = 'sflag constant byte address 0x0 - dummy sync flag']
  #allocation16 [shape = 's32[]', space=sflag, size = 0x4, offset = 0, fixed_abs, tag = 'sflag constant byte address 0x0 - dummy sync flag']
  #allocation17 [shape = 's32[]', space=sflag, size = 0x4, offset = 0, fixed_abs, tag = 'sflag constant byte address 0x0 - dummy sync flag']
  #allocation18 [shape = 's32[]', space=sflag, size = 0x4, offset = 0, fixed_abs, tag = 'sflag constant byte address 0x0 - dummy sync flag']
  #allocation19 [shape = 's32[]', space=sflag, size = 0x4, offset = 0, fixed_abs, tag = 'sflag constant byte address 0x0 - dummy sync flag']
  #allocation20 [shape = 's32[]', space=sflag, size = 0x4, offset = 0, fixed_abs, tag = 'sflag constant byte address 0x0 - dummy sync flag']
  #allocation21 [shape = 's32[]', space=sflag, size = 0x4, offset = 0, fixed_abs, tag = 'sflag constant byte address 0x0 - dummy sync flag']
  #allocation22 [shape = 's32[]', space=sflag, size = 0x4, offset = 0, fixed_abs, tag = 'sflag constant byte address 0x0 - dummy sync flag']
  #allocation23 [shape = 's32[]', space=sflag, size = 0x4, offset = 0, fixed_abs, tag = 'sflag constant byte address 0x0 - dummy sync flag']
  #allocation24 [shape = 's32[]', space=sflag, size = 0x4, offset = 0, fixed_abs, tag = 'sflag constant byte address 0x0 - dummy sync flag']
  #allocation25 [shape = 's32[]', space=sflag, size = 0x4, offset = 0, fixed_abs, tag = 'sflag constant byte address 0x0 - dummy sync flag']
  #allocation26 [shape = 's32[]', space=sflag, size = 0x4, offset = 0, fixed_abs, tag = 'sflag constant byte address 0x0 - dummy sync flag']
  #allocation27 [shape = 's32[]', space=sflag, size = 0x4, offset = 0, fixed_abs, tag = 'sflag constant byte address 0x0 - dummy sync flag']
  #allocation28 [shape = 's32[]', space=sflag, size = 0x4, offset = 0, fixed_abs, tag = 'sflag constant byte address 0x0 - dummy sync flag']
  #allocation29 [shape = 's32[]', space=sflag, size = 0x4, offset = 0, fixed_abs, tag = 'sflag constant byte address 0x0 - dummy sync flag']
  #allocation30 [shape = 's32[]', space=sflag, size = 0x4, offset = 0, fixed_abs, tag = 'sflag constant byte address 0x0 - dummy sync flag']
  #allocation31 [shape = 's32[]', space=sflag, size = 0x4, offset = 0, fixed_abs, tag = 'sflag constant byte address 0x0 - dummy sync flag']
  #allocation32 [shape = 's32[]', space=sflag, size = 0x4, offset = 0, fixed_abs, tag = 'sflag constant byte address 0x0 - dummy sync flag']
  #allocation33 [shape = 's32[]', space=sflag, size = 0x4, offset = 0, fixed_abs, tag = 'sflag constant byte address 0x0 - dummy sync flag']
  #allocation34 [shape = 's32[]', space=sflag, size = 0x4, offset = 0, fixed_abs, tag = 'sflag constant byte address 0x0 - dummy sync flag']
  #allocation35 [shape = 's32[]', space=sflag, size = 0x4, offset = 0, fixed_abs, tag = 'sflag constant byte address 0x0 - dummy sync flag']
  #allocation36 [shape = 's32[]', space=sflag, size = 0x4, offset = 0, fixed_abs, tag = 'sflag constant byte address 0x0 - dummy sync flag']
  #allocation37 [shape = 's32[]', space=sflag, size = 0x4, offset = 0, fixed_abs, tag = 'sflag constant byte address 0x0 - dummy sync flag']
  #allocation38 [shape = 's32[]', space=sflag, size = 0x4, offset = 0, fixed_abs, tag = 'sflag constant byte address 0x0 - dummy sync flag']
  #allocation39 [shape = 's32[]', space=sflag, size = 0x4, offset = 0, fixed_abs, tag = 'sflag constant byte address 0x0 - dummy sync flag']
  #allocation40 [shape = 's32[]', space=sflag, size = 0x4, offset = 0, fixed_abs, tag = 'sflag constant byte address 0x0 - dummy sync flag']
  #allocation41 [shape = 's32[]', space=sflag, size = 0x4, offset = 0, fixed_abs, tag = 'sflag constant byte address 0x0 - dummy sync flag']
  %s0 = inlined_call_operand.hbm [shape: s32[16], index: 0, kind: input, shape index: {}]
  %s1 = inlined_call_operand.hbm [shape: f32[100,128], index: 1, kind: input, shape index: {}]
  %s2 = inlined_call_operand.hbm [shape: f32[16,128], index: 2, kind: output, shape index: {}]
  %s3 = sld [smem:[#allocation0]]
  $region97: #{tpu_custom_call.1} parent=0
    _
  %s5 = ssub.s32 1, %s3
  %s6 = scalar_select 0, %s5, %s3
  %s8 = sshll.u32 %s0, 4
  %s9 = int_to_ptr.hbm [resolvable:$true] %s8
  %11 = dma.hbm_to_smem %s9, 16, [#allocation5], [#allocation4]
  %13 = dma.done [#allocation4], 16
  %14 = sfence
  $region1: #{tpu_custom_call.1} parent=0
    #allocation6 [shape = 'u8[8192]{0}', space=vmem, size = 0x2000, scoped, tag = 'output window, operand 0']
    #allocation7 [shape = 's32[2]{0}', space=sflag, size = 0x8, scoped, tag = 'scoped memory for tpu_custom_call.1']
    %15 = vsyncpa [#allocation7], 0
    %s16 = scalar_lea.sflag [#allocation7], 1
    %17 = vsyncpa %s16, 0
    loop: start=0, step=1, limit=3
    $region2: #{tpu_custom_call.1} parent=1 // loop_pre_header
      _
    $region3: #{tpu_custom_call.1} parent=1 // loop_header
      %s19 = sphi 0, %s23
      %p20 = scmp.ge.s32.totalorder %s19, 3
      %s28 = sphi 0, %s30
      %s31 = sphi 0, %s28
      %s41 = sphi 0, %s31
    $region4: #{tpu_custom_call.1} parent=1 // loop_header_branch
      %22 = sbr.rel (%p20) target = $region8
    $region5: #{tpu_custom_call.1} parent=1 // loop_body
      %s24 = ssub.s32 %s19, 1
      %s25 = sadd.s32 %s19, 1
      %s26 = ssub.s32 %s19, %s25
      %p27 = scmp.eq.s32.totalorder %s26, 0
      %s29 = sadd.s32 %s28, 1
      %s30 = scalar_select %p27, %s28, %s29
      %p32 = pneg %p27
      %p33 = scmp.eq.s32.totalorder %s19, 1
      %p34 = por %p32, %p33
      %p35 = scmp.ne.s32.totalorder %s28, %s31
      %p36 = scmp.eq.s32.totalorder %s19, 0
      %p37 = por %p35, %p36
      %p38 = scmp.ne.s32.totalorder %s28, %s31
      %p39 = scmp.eq.s32.totalorder %s24, 1
      %p40 = por %p38, %p39
      %p42 = scmp.ne.s32.totalorder %s31, %s41
      %p43 = scmp.eq.s32.totalorder %s24, 0
      %p44 = por %p42, %p43
      %p45 = scmp.lt.s32.totalorder %s19, 2
      // Predicated region
      $region9: #{tpu_custom_call.1} parent=5 // pred_check
        %p46 = pneg %p45
      $region10: #{tpu_custom_call.1} parent=5 // pred_check_branch
        %48 = sbr.rel (%p46) target = $region12
      $region11: #{tpu_custom_call.1} parent=5 // pred_region
        %p49 = pneg %p37
        %p50 = pneg %p34
        %s51 = sand.u32 %s28, 1
        %s52 = scalar_lea.sflag [#allocation7], %s51
        %s53 = sand.u32 %s28, 1
        %s54 = smul.addr %s53, 8
        %s55 = scalar_lea.vmem [#allocation6], %s54
        %p56 = scmp.eq.s32.totalorder %s19, 0
        // Predicated region
        $region13: #{tpu_custom_call.1} parent=11 // pred_check
          %p57 = pneg %p56
        $region14: #{tpu_custom_call.1} parent=11 // pred_check_branch
          %59 = sbr.rel (%p57) target = $region16
        $region15: #{tpu_custom_call.1} parent=11 // pred_region
          %s60 = sld [smem:[#allocation5]]
          %s61 = scalar_lea.hbm %s1, %s60
          // Predicated region
          $region17: #{tpu_custom_call.1} parent=15 // pred_check
            _
          $region18: #{tpu_custom_call.1} parent=15 // pred_check_branch
            %63 = sbr.rel target = $region20
          $region19: #{tpu_custom_call.1} parent=15 // pred_region
            %64 = sst [smem:[#allocation10]] [#allocation9]
            %65 = sst [smem:[#allocation11]] [#allocation8]
          $region20: #{tpu_custom_call.1} parent=15 // pred_fallthru
            _
          %67 = shalt.err (0)
          %s69 = sshll.u32 %s61, 4
          %s70 = int_to_ptr.hbm [resolvable:$true] %s69
          %s71 = sshll.u32 [#allocation2], 4
          %s72 = int_to_ptr.vmem [resolvable:$true] %s71
          %74 = dma.hbm_to_vmem [thread:$0]  %s70, 16, %s72, [#allocation3]
          %s75 = sld [smem:[#allocation5 + $0x1]]
          %s76 = scalar_lea.hbm %s1, %s75
          %s77 = scalar_lea.vmem [#allocation2], 1
          %s78 = scalar_lea.sflag [#allocation3], 1
          // Predicated region
          $region21: #{tpu_custom_call.1} parent=15 // pred_check
            _
          $region22: #{tpu_custom_call.1} parent=15 // pred_check_branch
            %80 = sbr.rel target = $region24
          $region23: #{tpu_custom_call.1} parent=15 // pred_region
            %81 = sst [smem:[#allocation10]] [#allocation13]
            %82 = sst [smem:[#allocation11]] [#allocation12]
          $region24: #{tpu_custom_call.1} parent=15 // pred_fallthru
            _
          %84 = shalt.err (0)
          %s86 = sshll.u32 %s76, 4
          %s87 = int_to_ptr.hbm [resolvable:$true] %s86
          %s88 = sshll.u32 %s77, 4
          %s89 = int_to_ptr.vmem [resolvable:$true] %s88
          %91 = dma.hbm_to_vmem [thread:$0]  %s87, 16, %s89, %s78
          %s92 = sld [smem:[#allocation5 + $0x2]]
          %s93 = scalar_lea.hbm %s1, %s92
          %s94 = scalar_lea.vmem [#allocation2], 2
          %s95 = scalar_lea.sflag [#allocation3], 2
          // Predicated region
          $region25: #{tpu_custom_call.1} parent=15 // pred_check
            _
          $region26: #{tpu_custom_call.1} parent=15 // pred_check_branch
            %97 = sbr.rel target = $region28
          $region27: #{tpu_custom_call.1} parent=15 // pred_region
            %98 = sst [smem:[#allocation10]] [#allocation15]
            %99 = sst [smem:[#allocation11]] [#allocation14]
          $region28: #{tpu_custom_call.1} parent=15 // pred_fallthru
            _
          %101 = shalt.err (0)
          %s103 = sshll.u32 %s93, 4
          %s104 = int_to_ptr.hbm [resolvable:$true] %s103
          %s105 = sshll.u32 %s94, 4
          %s106 = int_to_ptr.vmem [resolvable:$true] %s105
          %108 = dma.hbm_to_vmem [thread:$0]  %s104, 16, %s106, %s95
          %s109 = sld [smem:[#allocation5 + $0x3]]
          %s110 = scalar_lea.hbm %s1, %s109
          %s111 = scalar_lea.vmem [#allocation2], 3
          %s112 = scalar_lea.sflag [#allocation3], 3
          // Predicated region
          $region29: #{tpu_custom_call.1} parent=15 // pred_check
            _
          $region30: #{tpu_custom_call.1} parent=15 // pred_check_branch
            %114 = sbr.rel target = $region32
          $region31: #{tpu_custom_call.1} parent=15 // pred_region
            %115 = sst [smem:[#allocation10]] [#allocation17]
            %116 = sst [smem:[#allocation11]] [#allocation16]
          $region32: #{tpu_custom_call.1} parent=15 // pred_fallthru
            _
          %118 = shalt.err (0)
          %s120 = sshll.u32 %s110, 4
          %s121 = int_to_ptr.hbm [resolvable:$true] %s120
          %s122 = sshll.u32 %s111, 4
          %s123 = int_to_ptr.vmem [resolvable:$true] %s122
          %125 = dma.hbm_to_vmem [thread:$0]  %s121, 16, %s123, %s112
          %s126 = sld [smem:[#allocation5 + $0x4]]
          %s127 = scalar_lea.hbm %s1, %s126
          %s128 = scalar_lea.vmem [#allocation2], 4
          %s129 = scalar_lea.sflag [#allocation3], 4
          // Predicated region
          $region33: #{tpu_custom_call.1} parent=15 // pred_check
            _
          $region34: #{tpu_custom_call.1} parent=15 // pred_check_branch
            %131 = sbr.rel target = $region36
          $region35: #{tpu_custom_call.1} parent=15 // pred_region
            %132 = sst [smem:[#allocation10]] [#allocation19]
            %133 = sst [smem:[#allocation11]] [#allocation18]
          $region36: #{tpu_custom_call.1} parent=15 // pred_fallthru
            _
          %135 = shalt.err (0)
          %s137 = sshll.u32 %s127, 4
          %s138 = int_to_ptr.hbm [resolvable:$true] %s137
          %s139 = sshll.u32 %s128, 4
          %s140 = int_to_ptr.vmem [resolvable:$true] %s139
          %142 = dma.hbm_to_vmem [thread:$0]  %s138, 16, %s140, %s129
          %s143 = sld [smem:[#allocation5 + $0x5]]
          %s144 = scalar_lea.hbm %s1, %s143
          %s145 = scalar_lea.vmem [#allocation2], 5
          %s146 = scalar_lea.sflag [#allocation3], 5
          // Predicated region
          $region37: #{tpu_custom_call.1} parent=15 // pred_check
            _
          $region38: #{tpu_custom_call.1} parent=15 // pred_check_branch
            %148 = sbr.rel target = $region40
          $region39: #{tpu_custom_call.1} parent=15 // pred_region
            %149 = sst [smem:[#allocation10]] [#allocation21]
            %150 = sst [smem:[#allocation11]] [#allocation20]
          $region40: #{tpu_custom_call.1} parent=15 // pred_fallthru
            _
          %152 = shalt.err (0)
          %s154 = sshll.u32 %s144, 4
          %s155 = int_to_ptr.hbm [resolvable:$true] %s154
          %s156 = sshll.u32 %s145, 4
          %s157 = int_to_ptr.vmem [resolvable:$true] %s156
          %159 = dma.hbm_to_vmem [thread:$0]  %s155, 16, %s157, %s146
          %s160 = sld [smem:[#allocation5 + $0x6]]
          %s161 = scalar_lea.hbm %s1, %s160
          %s162 = scalar_lea.vmem [#allocation2], 6
          %s163 = scalar_lea.sflag [#allocation3], 6
          // Predicated region
          $region41: #{tpu_custom_call.1} parent=15 // pred_check
            _
          $region42: #{tpu_custom_call.1} parent=15 // pred_check_branch
            %165 = sbr.rel target = $region44
          $region43: #{tpu_custom_call.1} parent=15 // pred_region
            %166 = sst [smem:[#allocation10]] [#allocation23]
            %167 = sst [smem:[#allocation11]] [#allocation22]
          $region44: #{tpu_custom_call.1} parent=15 // pred_fallthru
            _
          %169 = shalt.err (0)
          %s171 = sshll.u32 %s161, 4
          %s172 = int_to_ptr.hbm [resolvable:$true] %s171
          %s173 = sshll.u32 %s162, 4
          %s174 = int_to_ptr.vmem [resolvable:$true] %s173
          %176 = dma.hbm_to_vmem [thread:$0]  %s172, 16, %s174, %s163
          %s177 = sld [smem:[#allocation5 + $0x7]]
          %s178 = scalar_lea.hbm %s1, %s177
          %s179 = scalar_lea.vmem [#allocation2], 7
          %s180 = scalar_lea.sflag [#allocation3], 7
          // Predicated region
          $region45: #{tpu_custom_call.1} parent=15 // pred_check
            _
          $region46: #{tpu_custom_call.1} parent=15 // pred_check_branch
            %182 = sbr.rel target = $region48
          $region47: #{tpu_custom_call.1} parent=15 // pred_region
            %183 = sst [smem:[#allocation10]] [#allocation25]
            %184 = sst [smem:[#allocation11]] [#allocation24]
          $region48: #{tpu_custom_call.1} parent=15 // pred_fallthru
            _
          %186 = shalt.err (0)
          %s188 = sshll.u32 %s178, 4
          %s189 = int_to_ptr.hbm [resolvable:$true] %s188
          %s190 = sshll.u32 %s179, 4
          %s191 = int_to_ptr.vmem [resolvable:$true] %s190
          %193 = dma.hbm_to_vmem [thread:$0]  %s189, 16, %s191, %s180
        $region16: #{tpu_custom_call.1} parent=11 // pred_fallthru
          _
        %s194 = sadd.s32 %s19, 1
        %p195 = scmp.lt.s32.totalorder %s194, 2
        // Predicated region
        $region49: #{tpu_custom_call.1} parent=11 // pred_check
          %p196 = pneg %p195
        $region50: #{tpu_custom_call.1} parent=11 // pred_check_branch
          %198 = sbr.rel (%p196) target = $region52
        $region51: #{tpu_custom_call.1} parent=11 // pred_region
          %p199 = scmp.lt.s32.totalorder %s194, 0
          %s200 = ssub.s32 0, %s194
          %s201 = scalar_select %p199, %s200, %s194
          %s202 = sand.u32 %s201, 1
          %s203 = ssub.s32 0, %s202
          %s204 = scalar_select %p199, %s203, %s202
          %p205 = scmp.ne.s32.totalorder %s204, 0
          %p206 = scmp.lt.s32.totalorder %s204, 0
          %p207 = pnand %p206, %p205
          %p208 = pneg %p207
          %s209 = sadd.s32 %s204, 2
          %s210 = scalar_select %p208, %s209, %s204
          %s211 = smul.u32 %s194, 8
          %s212 = sld [smem:[#allocation5 + %s211]]
          %s213 = scalar_lea.hbm %s1, %s212
          %s214 = smul.u32 %s210, 8
          %s215 = scalar_lea.vmem [#allocation2], %s214
          %s216 = scalar_lea.sflag [#allocation3], %s214
          // Predicated region
          $region53: #{tpu_custom_call.1} parent=51 // pred_check
            _
          $region54: #{tpu_custom_call.1} parent=51 // pred_check_branch
            %218 = sbr.rel target = $region56
          $region55: #{tpu_custom_call.1} parent=51 // pred_region
            %219 = sst [smem:[#allocation10]] [#allocation27]
            %220 = sst [smem:[#allocation11]] [#allocation26]
          $region56: #{tpu_custom_call.1} parent=51 // pred_fallthru
            _
          %222 = shalt.err (0)
          %s224 = sshll.u32 %s213, 4
          %s225 = int_to_ptr.hbm [resolvable:$true] %s224
          %s226 = sshll.u32 %s215, 4
          %s227 = int_to_ptr.vmem [resolvable:$true] %s226
          %229 = dma.hbm_to_vmem [thread:$0]  %s225, 16, %s227, %s216
          %s230 = sadd.s32 %s211, 1
          %s231 = sld [smem:[#allocation5 + %s230]]
          %s232 = scalar_lea.hbm %s1, %s231
          %s233 = sadd.s32 1, %s214
          %s234 = scalar_lea.vmem [#allocation2], %s233
          %s235 = scalar_lea.sflag [#allocation3], %s233
          // Predicated region
          $region57: #{tpu_custom_call.1} parent=51 // pred_check
            _
          $region58: #{tpu_custom_call.1} parent=51 // pred_check_branch
            %237 = sbr.rel target = $region60
          $region59: #{tpu_custom_call.1} parent=51 // pred_region
            %238 = sst [smem:[#allocation10]] [#allocation29]
            %239 = sst [smem:[#allocation11]] [#allocation28]
          $region60: #{tpu_custom_call.1} parent=51 // pred_fallthru
            _
          %241 = shalt.err (0)
          %s243 = sshll.u32 %s232, 4
          %s244 = int_to_ptr.hbm [resolvable:$true] %s243
          %s245 = sshll.u32 %s234, 4
          %s246 = int_to_ptr.vmem [resolvable:$true] %s245
          %248 = dma.hbm_to_vmem [thread:$0]  %s244, 16, %s246, %s235
          %s249 = sadd.s32 %s211, 2
          %s250 = sld [smem:[#allocation5 + %s249]]
          %s251 = scalar_lea.hbm %s1, %s250
          %s252 = sadd.s32 2, %s214
          %s253 = scalar_lea.vmem [#allocation2], %s252
          %s254 = scalar_lea.sflag [#allocation3], %s252
          // Predicated region
          $region61: #{tpu_custom_call.1} parent=51 // pred_check
            _
          $region62: #{tpu_custom_call.1} parent=51 // pred_check_branch
            %256 = sbr.rel target = $region64
          $region63: #{tpu_custom_call.1} parent=51 // pred_region
            %257 = sst [smem:[#allocation10]] [#allocation31]
            %258 = sst [smem:[#allocation11]] [#allocation30]
          $region64: #{tpu_custom_call.1} parent=51 // pred_fallthru
            _
          %260 = shalt.err (0)
          %s262 = sshll.u32 %s251, 4
          %s263 = int_to_ptr.hbm [resolvable:$true] %s262
          %s264 = sshll.u32 %s253, 4
          %s265 = int_to_ptr.vmem [resolvable:$true] %s264
          %267 = dma.hbm_to_vmem [thread:$0]  %s263, 16, %s265, %s254
          %s268 = sadd.s32 %s211, 3
          %s269 = sld [smem:[#allocation5 + %s268]]
          %s270 = scalar_lea.hbm %s1, %s269
          %s271 = sadd.s32 3, %s214
          %s272 = scalar_lea.vmem [#allocation2], %s271
          %s273 = scalar_lea.sflag [#allocation3], %s271
          // Predicated region
          $region65: #{tpu_custom_call.1} parent=51 // pred_check
            _
          $region66: #{tpu_custom_call.1} parent=51 // pred_check_branch
            %275 = sbr.rel target = $region68
          $region67: #{tpu_custom_call.1} parent=51 // pred_region
            %276 = sst [smem:[#allocation10]] [#allocation33]
            %277 = sst [smem:[#allocation11]] [#allocation32]
          $region68: #{tpu_custom_call.1} parent=51 // pred_fallthru
            _
          %279 = shalt.err (0)
          %s281 = sshll.u32 %s270, 4
          %s282 = int_to_ptr.hbm [resolvable:$true] %s281
          %s283 = sshll.u32 %s272, 4
          %s284 = int_to_ptr.vmem [resolvable:$true] %s283
          %286 = dma.hbm_to_vmem [thread:$0]  %s282, 16, %s284, %s273
          %s287 = sadd.s32 %s211, 4
          %s288 = sld [smem:[#allocation5 + %s287]]
          %s289 = scalar_lea.hbm %s1, %s288
          %s290 = sadd.s32 4, %s214
          %s291 = scalar_lea.vmem [#allocation2], %s290
          %s292 = scalar_lea.sflag [#allocation3], %s290
          // Predicated region
          $region69: #{tpu_custom_call.1} parent=51 // pred_check
            _
          $region70: #{tpu_custom_call.1} parent=51 // pred_check_branch
            %294 = sbr.rel target = $region72
          $region71: #{tpu_custom_call.1} parent=51 // pred_region
            %295 = sst [smem:[#allocation10]] [#allocation35]
            %296 = sst [smem:[#allocation11]] [#allocation34]
          $region72: #{tpu_custom_call.1} parent=51 // pred_fallthru
            _
          %298 = shalt.err (0)
          %s300 = sshll.u32 %s289, 4
          %s301 = int_to_ptr.hbm [resolvable:$true] %s300
          %s302 = sshll.u32 %s291, 4
          %s303 = int_to_ptr.vmem [resolvable:$true] %s302
          %305 = dma.hbm_to_vmem [thread:$0]  %s301, 16, %s303, %s292
          %s306 = sadd.s32 %s211, 5
          %s307 = sld [smem:[#allocation5 + %s306]]
          %s308 = scalar_lea.hbm %s1, %s307
          %s309 = sadd.s32 5, %s214
          %s310 = scalar_lea.vmem [#allocation2], %s309
          %s311 = scalar_lea.sflag [#allocation3], %s309
          // Predicated region
          $region73: #{tpu_custom_call.1} parent=51 // pred_check
            _
          $region74: #{tpu_custom_call.1} parent=51 // pred_check_branch
            %313 = sbr.rel target = $region76
          $region75: #{tpu_custom_call.1} parent=51 // pred_region
            %314 = sst [smem:[#allocation10]] [#allocation37]
            %315 = sst [smem:[#allocation11]] [#allocation36]
          $region76: #{tpu_custom_call.1} parent=51 // pred_fallthru
            _
          %317 = shalt.err (0)
          %s319 = sshll.u32 %s308, 4
          %s320 = int_to_ptr.hbm [resolvable:$true] %s319
          %s321 = sshll.u32 %s310, 4
          %s322 = int_to_ptr.vmem [resolvable:$true] %s321
          %324 = dma.hbm_to_vmem [thread:$0]  %s320, 16, %s322, %s311
          %s325 = sadd.s32 %s211, 6
          %s326 = sld [smem:[#allocation5 + %s325]]
          %s327 = scalar_lea.hbm %s1, %s326
          %s328 = sadd.s32 6, %s214
          %s329 = scalar_lea.vmem [#allocation2], %s328
          %s330 = scalar_lea.sflag [#allocation3], %s328
          // Predicated region
          $region77: #{tpu_custom_call.1} parent=51 // pred_check
            _
          $region78: #{tpu_custom_call.1} parent=51 // pred_check_branch
            %332 = sbr.rel target = $region80
          $region79: #{tpu_custom_call.1} parent=51 // pred_region
            %333 = sst [smem:[#allocation10]] [#allocation39]
            %334 = sst [smem:[#allocation11]] [#allocation38]
          $region80: #{tpu_custom_call.1} parent=51 // pred_fallthru
            _
          %336 = shalt.err (0)
          %s338 = sshll.u32 %s327, 4
          %s339 = int_to_ptr.hbm [resolvable:$true] %s338
          %s340 = sshll.u32 %s329, 4
          %s341 = int_to_ptr.vmem [resolvable:$true] %s340
          %343 = dma.hbm_to_vmem [thread:$0]  %s339, 16, %s341, %s330
          %s344 = sadd.s32 %s211, 7
          %s345 = sld [smem:[#allocation5 + %s344]]
          %s346 = scalar_lea.hbm %s1, %s345
          %s347 = sadd.s32 7, %s214
          %s348 = scalar_lea.vmem [#allocation2], %s347
          %s349 = scalar_lea.sflag [#allocation3], %s347
          // Predicated region
          $region81: #{tpu_custom_call.1} parent=51 // pred_check
            _
          $region82: #{tpu_custom_call.1} parent=51 // pred_check_branch
            %351 = sbr.rel target = $region84
          $region83: #{tpu_custom_call.1} parent=51 // pred_region
            %352 = sst [smem:[#allocation10]] [#allocation41]
            %353 = sst [smem:[#allocation11]] [#allocation40]
          $region84: #{tpu_custom_call.1} parent=51 // pred_fallthru
            _
          %355 = shalt.err (0)
          %s357 = sshll.u32 %s346, 4
          %s358 = int_to_ptr.hbm [resolvable:$true] %s357
          %s359 = sshll.u32 %s348, 4
          %s360 = int_to_ptr.vmem [resolvable:$true] %s359
          %362 = dma.hbm_to_vmem [thread:$0]  %s358, 16, %s360, %s349
        $region52: #{tpu_custom_call.1} parent=11 // pred_fallthru
          _
        %p363 = scmp.lt.s32.totalorder %s19, 0
        %s364 = ssub.s32 0, %s19
        %s365 = scalar_select %p363, %s364, %s19
        %s366 = sand.u32 %s365, 1
        %s367 = ssub.s32 0, %s366
        %s368 = scalar_select %p363, %s367, %s366
        %p369 = scmp.ne.s32.totalorder %s368, 0
        %p370 = scmp.lt.s32.totalorder %s368, 0
        %p371 = pnand %p370, %p369
        %p372 = pneg %p371
        %s373 = sadd.s32 %s368, 2
        %s374 = scalar_select %p372, %s373, %s368
        %s375 = smul.u32 %s374, 8
        %s376 = scalar_lea.sflag [#allocation3], %s375
        %378 = dma.done %s376, 16
        %s379 = sadd.s32 1, %s375
        %s380 = scalar_lea.sflag [#allocation3], %s379
        %382 = dma.done %s380, 16
        %s383 = sadd.s32 2, %s375
        %s384 = scalar_lea.sflag [#allocation3], %s383
        %386 = dma.done %s384, 16
        %s387 = sadd.s32 3, %s375
        %s388 = scalar_lea.sflag [#allocation3], %s387
        %390 = dma.done %s388, 16
        %s391 = sadd.s32 4, %s375
        %s392 = scalar_lea.sflag [#allocation3], %s391
        %394 = dma.done %s392, 16
        %s395 = sadd.s32 5, %s375
        %s396 = scalar_lea.sflag [#allocation3], %s395
        %398 = dma.done %s396, 16
        %s399 = sadd.s32 6, %s375
        %s400 = scalar_lea.sflag [#allocation3], %s399
        %402 = dma.done %s400, 16
        %s403 = sadd.s32 7, %s375
        %s404 = scalar_lea.sflag [#allocation3], %s403
        %406 = dma.done %s404, 16
        %s407 = scalar_lea.vmem [#allocation2], %s375
        %v408 = vld [vmem:[%s407] sm:$0xff]
        %v409 = vmul.f32 %v408, 11.313708
        %410 = vst [vmem:[%s55] sm:$0xff] %v409
        %s411 = sand.u32 %s28, 1
        %s412 = scalar_lea.sflag [#allocation7], %s411
        %s413 = sand.u32 %s28, 1
        %s414 = smul.addr %s413, 8
        %s415 = scalar_lea.vmem [#allocation6], %s414
        // Predicated region
        $region85: #{tpu_custom_call.1} parent=11 // pred_check
          %p416 = pneg %p34
        $region86: #{tpu_custom_call.1} parent=11 // pred_check_branch
          %418 = sbr.rel (%p416) target = $region88
        $region87: #{tpu_custom_call.1} parent=11 // pred_region
          %420 = vsyncadd %s412, 0
          %s421 = smul.addr %s19, 8
          %s422 = scalar_lea.hbm %s2, %s421
          %s424 = sshll.u32 %s415, 4
          %s425 = int_to_ptr.vmem [resolvable:$true] %s424
          %s426 = sshll.u32 %s422, 4
          %s427 = int_to_ptr.hbm [resolvable:$true] %s426
          %429 = dma.vmem_to_hbm [thread:$0]  %s425, 128, %s427, %s412
        $region88: #{tpu_custom_call.1} parent=11 // pred_fallthru
          _
      $region12: #{tpu_custom_call.1} parent=5 // pred_fallthru
        _
      %p430 = scmp.le.s32.totalorder 1, %s19
      // Predicated region
      $region89: #{tpu_custom_call.1} parent=5 // pred_check
        %p431 = pneg %p430
      $region90: #{tpu_custom_call.1} parent=5 // pred_check_branch
        %433 = sbr.rel (%p431) target = $region92
      $region91: #{tpu_custom_call.1} parent=5 // pred_region
        %s434 = ssub.s32 %s19, 1
        // Predicated region
        $region93: #{tpu_custom_call.1} parent=91 // pred_check
          %p435 = pneg %p40
        $region94: #{tpu_custom_call.1} parent=91 // pred_check_branch
          %437 = sbr.rel (%p435) target = $region96
        $region95: #{tpu_custom_call.1} parent=91 // pred_region
          %s438 = sand.u32 %s31, 1
          %s439 = scalar_lea.sflag [#allocation7], %s438
          %s440 = sand.u32 %s31, 1
          %s441 = smul.addr %s440, 8
          %s442 = scalar_lea.vmem [#allocation6], %s441
          %444 = dma.done %s439, 128
        $region96: #{tpu_custom_call.1} parent=91 // pred_fallthru
          _
      $region92: #{tpu_custom_call.1} parent=5 // pred_fallthru
        _
    $region6: #{tpu_custom_call.1} parent=1 // loop_footer
      %s23 = sadd.s32 1, %s19
    $region7: #{tpu_custom_call.1} parent=1 // loop_footer_branch
      %18 = sbr.rel target = $region3
    $region8: #{tpu_custom_call.1} parent=1 // loop_exit
      _
    %445 = vsyncpa [#allocation7], 1
    %s446 = scalar_lea.sflag [#allocation7], 1
    %447 = vsyncpa %s446, 1
  %448 = vsyncmov [#allocation3]
  %s449 = vpop.sfrf %448
  %p450 = scmp.eq.s32.totalorder %s449, 0
  %p451 = pneg %p450
  %453 = shalt.err (%p451)
  %s454 = scalar_lea.sflag [#allocation3], 1
  %455 = vsyncmov %s454
  %s456 = vpop.sfrf %455
  %p457 = scmp.eq.s32.totalorder %s456, 0
  %p458 = pneg %p457
  %460 = shalt.err (%p458)
  %s461 = scalar_lea.sflag [#allocation3], 2
  %462 = vsyncmov %s461
  %s463 = vpop.sfrf %462
  %p464 = scmp.eq.s32.totalorder %s463, 0
  %p465 = pneg %p464
  %467 = shalt.err (%p465)
  %s468 = scalar_lea.sflag [#allocation3], 3
  %469 = vsyncmov %s468
  %s470 = vpop.sfrf %469
  %p471 = scmp.eq.s32.totalorder %s470, 0
  %p472 = pneg %p471
  %474 = shalt.err (%p472)
  %s475 = scalar_lea.sflag [#allocation3], 4
  %476 = vsyncmov %s475
  %s477 = vpop.sfrf %476
  %p478 = scmp.eq.s32.totalorder %s477, 0
  %p479 = pneg %p478
  %481 = shalt.err (%p479)
  %s482 = scalar_lea.sflag [#allocation3], 5
  %483 = vsyncmov %s482
  %s484 = vpop.sfrf %483
  %p485 = scmp.eq.s32.totalorder %s484, 0
  %p486 = pneg %p485
  %488 = shalt.err (%p486)
  %s489 = scalar_lea.sflag [#allocation3], 6
  %490 = vsyncmov %s489
  %s491 = vpop.sfrf %490
  %p492 = scmp.eq.s32.totalorder %s491, 0
  %p493 = pneg %p492
  %495 = shalt.err (%p493)
  %s496 = scalar_lea.sflag [#allocation3], 7
  %497 = vsyncmov %s496
  %s498 = vpop.sfrf %497
  %p499 = scmp.eq.s32.totalorder %s498, 0
  %p500 = pneg %p499
  %502 = shalt.err (%p500)
  %s503 = scalar_lea.sflag [#allocation3], 8
  %504 = vsyncmov %s503
  %s505 = vpop.sfrf %504
  %p506 = scmp.eq.s32.totalorder %s505, 0
  %p507 = pneg %p506
  %509 = shalt.err (%p507)
  %s510 = scalar_lea.sflag [#allocation3], 9
  %511 = vsyncmov %s510
  %s512 = vpop.sfrf %511
  %p513 = scmp.eq.s32.totalorder %s512, 0
  %p514 = pneg %p513
  %516 = shalt.err (%p514)
  %s517 = scalar_lea.sflag [#allocation3], 10
  %518 = vsyncmov %s517
  %s519 = vpop.sfrf %518
  %p520 = scmp.eq.s32.totalorder %s519, 0
  %p521 = pneg %p520
  %523 = shalt.err (%p521)
  %s524 = scalar_lea.sflag [#allocation3], 11
  %525 = vsyncmov %s524
  %s526 = vpop.sfrf %525
  %p527 = scmp.eq.s32.totalorder %s526, 0
  %p528 = pneg %p527
  %530 = shalt.err (%p528)
  %s531 = scalar_lea.sflag [#allocation3], 12
  %532 = vsyncmov %s531
  %s533 = vpop.sfrf %532
  %p534 = scmp.eq.s32.totalorder %s533, 0
  %p535 = pneg %p534
  %537 = shalt.err (%p535)
  %s538 = scalar_lea.sflag [#allocation3], 13
  %539 = vsyncmov %s538
  %s540 = vpop.sfrf %539
  %p541 = scmp.eq.s32.totalorder %s540, 0
  %p542 = pneg %p541
  %544 = shalt.err (%p542)
  %s545 = scalar_lea.sflag [#allocation3], 14
  %546 = vsyncmov %s545
  %s547 = vpop.sfrf %546
  %p548 = scmp.eq.s32.totalorder %s547, 0
  %p549 = pneg %p548
  %551 = shalt.err (%p549)
  %s552 = scalar_lea.sflag [#allocation3], 15
  %553 = vsyncmov %s552
  %s554 = vpop.sfrf %553
  %p555 = scmp.eq.s32.totalorder %s554, 0
  %p556 = pneg %p555
  %558 = shalt.err (%p556)

</llo_original>
